<compile_context>
chip_gen: v6e
topology: v6e:2x2x1
jax: 0.10.0
libtpu: 0.0.40
codegen_flags: <defaults>
</compile_context>

<pallas_src>
import functools

import jax
import jax.numpy as jnp
from jax import lax
from jax.experimental import pallas as pl
from jax.experimental.pallas import tpu as pltpu

NEG_SLOPE = 0.01
BN_EPS = 1e-5

# 3x3 tap offsets, row-major — must match the weight-matrix column ordering
# built in the wrapper: column = ((dy+1)*3 + (dx+1)) * Cin + ci.
TAPS = tuple((dy, dx) for dy in (-1, 0, 1) for dx in (-1, 0, 1))
CENTER_TAP = 4  # (dy, dx) == (0, 0): always valid, never masked.


def _leaky(x):
    return jnp.where(x > 0, x, NEG_SLOPE * x)


def _conv3x3_flat(x_flat, w_mat, masks, W, L):
    """3x3 'SAME' conv on CHW-flat (batch-folded) layout.

    x_flat: (Cin, L) f32      — channels in sublanes, folded flat spatial in lanes.
    w_mat : (Cout, 9*Cin) bf16 — columns ordered (ky, kx, cin).
    masks : list of 9 entries, (Cin, L) f32 0/1 (None for the center tap).
    returns (Cout, L) f32.
    """
    cols = []
    for t, (dy, dx) in enumerate(TAPS):
        k = dy * W + dx
        # r[:, s] = x[:, (s + k) % L]  ==  jnp.roll(x, -k)  (XLU lane rotate).
        shifted = x_flat if k == 0 else pltpu.roll(x_flat, shift=(-k) % L, axis=1)
        m = masks[t]
        cols.append(shifted if m is None else shifted * m)
    # Single im2col matrix -> one K=9*Cin MXU matmul (bf16 operands, f32 acc).
    patches = jnp.concatenate(cols, axis=0).astype(jnp.bfloat16)  # (9*Cin, L)
    return jnp.dot(w_mat, patches, preferred_element_type=jnp.float32)


def basic_block_kernel(x_ref, mask_ref, w1_ref, w2_ref,
                       s1_ref, b1_ref, s2_ref, b2_ref, out_ref, *, W):
    # x_ref   : (1, C, L) f32  — conv1 input AND residual (single stream)
    # mask_ref: (9, L)    f32  — precomputed 0/1 tap validity (tiled per image)
    # w1/w2   : (C, 9*C)  bf16 — im2col weight matrices
    # s*/b*   : (C, 1)    f32  — folded BN scale / bias (per channel)
    # out_ref : (1, C, L)
    C = x_ref.shape[1]
    L = x_ref.shape[2]
    x = x_ref[0]                                          # (C, L) f32

    # Hoist masks once (shared by both convs); skip the all-true center tap.
    masks = [None if t == CENTER_TAP
             else jnp.broadcast_to(mask_ref[pl.ds(t, 1), :], (C, L))
             for t in range(9)]

    # Hoist weights / BN params once (no repeated implicit broadcasts in the
    # hot region).
    w1 = w1_ref[...]
    w2 = w2_ref[...]
    s1 = s1_ref[...]
    b1 = b1_ref[...]
    s2 = s2_ref[...]
    b2 = b2_ref[...]

    # conv1 -> BN1 -> LeakyReLU
    y1 = _leaky(_conv3x3_flat(x, w1, masks, W, L) * s1 + b1)

    # conv2 -> BN2 -> +residual -> LeakyReLU
    y2 = _leaky(_conv3x3_flat(y1, w2, masks, W, L) * s2 + b2 + x)

    out_ref[0] = y2.astype(out_ref.dtype)                 # lane-dense store


def _tap_masks(H, W, n_images):
    """(9, n_images*H*W) f32 0/1 tap-validity masks, tiled per image."""
    S = H * W
    yy, xx = jnp.meshgrid(jnp.arange(H, dtype=jnp.int32),
                          jnp.arange(W, dtype=jnp.int32), indexing="ij")
    yy = yy.reshape(1, S)
    xx = xx.reshape(1, S)
    rows = []
    for dy, dx in TAPS:
        rows.append(((yy + dy) >= 0) & ((yy + dy) < H) &
                    ((xx + dx) >= 0) & ((xx + dx) < W))
    m = jnp.concatenate(rows, axis=0).astype(jnp.float32)     # (9, S)
    return jnp.tile(m, (1, n_images))                         # (9, n_images*S)


def basic_block_pallas(x_nchw, w1_mat, w2_mat, s1, b1, s2, b2, *, num_blocks=1):
    """x_nchw: (N,C,H,W) f32.  w*: (C, 9*C) bf16.  s*/b*: (C, 1) f32.

    num_blocks: grid size. 1 folds the whole batch into a single lane-dense
    block (best on v5e/v6e, single TensorCore).  On v7x with larger N use 2
    so each TensorCore gets one folded block.
    """
    N, C, H, W = x_nchw.shape
    S = H * W
    assert N % num_blocks == 0
    NB = N // num_blocks
    L = NB * S

    # Fold the batch into the lane axis: (num_blocks, C, NB*S).
    x_fold = jnp.transpose(x_nchw.reshape(num_blocks, NB, C, S),
                           (0, 2, 1, 3)).reshape(num_blocks, C, L)
    masks = _tap_masks(H, W, NB)

    kern = functools.partial(basic_block_kernel, W=W)
    out = pl.pallas_call(
        kern,
        out_shape=jax.ShapeDtypeStruct((num_blocks, C, L), x_nchw.dtype),
        grid_spec=pl.GridSpec(
            grid=(num_blocks,),
            in_specs=[
                pl.BlockSpec((1, C, L), lambda g: (g, 0, 0)),   # x (+residual)
                pl.BlockSpec((9, L), lambda g: (0, 0)),         # tap masks
                pl.BlockSpec((C, 9 * C), lambda g: (0, 0)),     # w1
                pl.BlockSpec((C, 9 * C), lambda g: (0, 0)),     # w2
                pl.BlockSpec((C, 1), lambda g: (0, 0)),         # s1
                pl.BlockSpec((C, 1), lambda g: (0, 0)),         # b1
                pl.BlockSpec((C, 1), lambda g: (0, 0)),         # s2
                pl.BlockSpec((C, 1), lambda g: (0, 0)),         # b2
            ],
            out_specs=pl.BlockSpec((1, C, L), lambda g: (g, 0, 0)),
        ),
        compiler_params=pltpu.CompilerParams(
            dimension_semantics=("parallel",)),
    )(x_fold, masks, w1_mat, w2_mat, s1, b1, s2, b2)

    # Unfold back to NCHW.
    return jnp.transpose(out.reshape(num_blocks, C, NB, S),
                         (0, 2, 1, 3)).reshape(N, C, H, W)


def reference_basic_block(x_nchw, w1_oihw, w2_oihw, s1, b1, s2, b2):
    """Pure-JAX reference (eval-mode BN folded), bf16 conv operands like the kernel."""
    dn = ("NCHW", "OIHW", "NCHW")

    def conv(x, w):
        return lax.conv_general_dilated(
            x.astype(jnp.bfloat16), w.astype(jnp.bfloat16), (1, 1), "SAME",
            dimension_numbers=dn, preferred_element_type=jnp.float32)

    s1_ = s1.reshape(1, -1, 1, 1)
    b1_ = b1.reshape(1, -1, 1, 1)
    s2_ = s2.reshape(1, -1, 1, 1)
    b2_ = b2.reshape(1, -1, 1, 1)
    y = _leaky(conv(x_nchw, w1_oihw) * s1_ + b1_)
    y = conv(y, w2_oihw) * s2_ + b2_ + x_nchw
    return _leaky(y)


if __name__ == "__main__":
    # Shapes consistent with BasicBlock(inplanes=planes=8, stride=1, downsample=None).
    # H*W = 256 -> lane-dense (multiple of 128); whole batch folds to 512 lanes.
    N, C, H, W = 2, 8, 16, 16

    key = jax.random.PRNGKey(0)
    k1, k2, k3, k4, k5, k6, k7 = jax.random.split(key, 7)

    # Input in native PyTorch NCHW layout.
    x_nchw = jax.random.normal(k1, (N, C, H, W), jnp.float32)

    # Conv weights in PyTorch OIHW layout, bias=False.
    w1_oihw = jax.random.normal(k2, (C, C, 3, 3), jnp.float32) * 0.2
    w2_oihw = jax.random.normal(k3, (C, C, 3, 3), jnp.float32) * 0.2

    # BatchNorm parameters, folded into per-channel scale/bias (eval mode).
    gamma1 = 1.0 + 0.1 * jax.random.normal(k4, (C,), jnp.float32)
    beta1 = 0.1 * jax.random.normal(k5, (C,), jnp.float32)
    mean1 = 0.05 * jnp.arange(C, dtype=jnp.float32)
    var1 = 1.0 + 0.02 * jnp.arange(C, dtype=jnp.float32)

    gamma2 = 1.0 + 0.1 * jax.random.normal(k6, (C,), jnp.float32)
    beta2 = 0.1 * jax.random.normal(k7, (C,), jnp.float32)
    mean2 = -0.03 * jnp.arange(C, dtype=jnp.float32)
    var2 = 1.0 + 0.05 * jnp.arange(C, dtype=jnp.float32)

    s1 = gamma1 / jnp.sqrt(var1 + BN_EPS)
    b1 = beta1 - mean1 * s1
    s2 = gamma2 / jnp.sqrt(var2 + BN_EPS)
    b2 = beta2 - mean2 * s2

    # Weight prep: OIHW (Cout,Cin,3,3) -> (Cout, ky, kx, Cin) -> (Cout, 9*Cin),
    # pre-cast to bf16 for the MXU (accumulation stays f32 in-kernel).
    w1_mat = jnp.transpose(w1_oihw, (0, 2, 3, 1)).reshape(C, 9 * C).astype(jnp.bfloat16)
    w2_mat = jnp.transpose(w2_oihw, (0, 2, 3, 1)).reshape(C, 9 * C).astype(jnp.bfloat16)

    out = basic_block_pallas(x_nchw, w1_mat, w2_mat,
                             s1.reshape(C, 1), b1.reshape(C, 1),
                             s2.reshape(C, 1), b2.reshape(C, 1),
                             num_blocks=1)
    out = jax.block_until_ready(out)

    ref = reference_basic_block(x_nchw, w1_oihw, w2_oihw, s1, b1, s2, b2)
    ref = jax.block_until_ready(ref)

    assert out.shape == (N, C, H, W)
    assert jnp.allclose(out, ref, atol=5e-3, rtol=5e-3), (
        f"max abs err {jnp.max(jnp.abs(out - ref))}")

    print("KERNEL_OK")
</pallas_src>

<mosaic_0001>
module attributes {stable_mosaic.version = 11 : i64} {
  func.func @basic_block_kernel(%arg0: i32, %arg1: memref<1x8x512xf32, #tpu.memory_space<vmem>>, %arg2: memref<9x512xf32, #tpu.memory_space<vmem>>, %arg3: memref<8x72xbf16, #tpu.memory_space<vmem>>, %arg4: memref<8x72xbf16, #tpu.memory_space<vmem>>, %arg5: memref<8x1xf32, #tpu.memory_space<vmem>>, %arg6: memref<8x1xf32, #tpu.memory_space<vmem>>, %arg7: memref<8x1xf32, #tpu.memory_space<vmem>>, %arg8: memref<8x1xf32, #tpu.memory_space<vmem>>, %arg9: memref<1x8x512xf32, #tpu.memory_space<vmem>>) attributes {dimension_semantics = [#tpu.dimension_semantics<parallel>], iteration_bounds = array<i64: 1>, scalar_prefetch = 0 : i64, scratch_operands = 0 : i64, tpu.core_type = #tpu.core_type<tc>, window_params = [{transform_indices = @transform_0, window_bounds = array<i64: 1, 8, 512>}, {pipeline_mode = #tpu.pipeline_mode<synchronous>, transform_indices = @transform_1, window_bounds = array<i64: 9, 512>}, {pipeline_mode = #tpu.pipeline_mode<synchronous>, transform_indices = @transform_2, window_bounds = array<i64: 8, 72>}, {pipeline_mode = #tpu.pipeline_mode<synchronous>, transform_indices = @transform_3, window_bounds = array<i64: 8, 72>}, {pipeline_mode = #tpu.pipeline_mode<synchronous>, transform_indices = @transform_4, window_bounds = array<i64: 8, 1>}, {pipeline_mode = #tpu.pipeline_mode<synchronous>, transform_indices = @transform_5, window_bounds = array<i64: 8, 1>}, {pipeline_mode = #tpu.pipeline_mode<synchronous>, transform_indices = @transform_6, window_bounds = array<i64: 8, 1>}, {pipeline_mode = #tpu.pipeline_mode<synchronous>, transform_indices = @transform_7, window_bounds = array<i64: 8, 1>}, {transform_indices = @transform_8, window_bounds = array<i64: 1, 8, 512>}]} {
    %c0 = arith.constant 0 : index
    %c0_0 = arith.constant 0 : index
    %c0_1 = arith.constant 0 : index
    %0 = vector.load %arg1[%c0, %c0_0, %c0_1] : memref<1x8x512xf32, #tpu.memory_space<vmem>>, vector<1x8x512xf32>
    %1 = vector.shape_cast %0 : vector<1x8x512xf32> to vector<8x512xf32>
    %c0_2 = arith.constant 0 : index
    %c0_3 = arith.constant 0 : index
    %2 = vector.load %arg2[%c0_2, %c0_3] : memref<9x512xf32, #tpu.memory_space<vmem>>, vector<1x512xf32>
    %3 = vector.shape_cast %2 : vector<1x512xf32> to vector<1x512xf32>
    %4 = vector.broadcast %3 : vector<1x512xf32> to vector<8x512xf32>
    %c1 = arith.constant 1 : index
    %c0_4 = arith.constant 0 : index
    %5 = vector.load %arg2[%c1, %c0_4] : memref<9x512xf32, #tpu.memory_space<vmem>>, vector<1x512xf32>
    %6 = vector.shape_cast %5 : vector<1x512xf32> to vector<1x512xf32>
    %7 = vector.broadcast %6 : vector<1x512xf32> to vector<8x512xf32>
    %c2 = arith.constant 2 : index
    %c0_5 = arith.constant 0 : index
    %8 = vector.load %arg2[%c2, %c0_5] : memref<9x512xf32, #tpu.memory_space<vmem>>, vector<1x512xf32>
    %9 = vector.shape_cast %8 : vector<1x512xf32> to vector<1x512xf32>
    %10 = vector.broadcast %9 : vector<1x512xf32> to vector<8x512xf32>
    %c3 = arith.constant 3 : index
    %c0_6 = arith.constant 0 : index
    %11 = vector.load %arg2[%c3, %c0_6] : memref<9x512xf32, #tpu.memory_space<vmem>>, vector<1x512xf32>
    %12 = vector.shape_cast %11 : vector<1x512xf32> to vector<1x512xf32>
    %13 = vector.broadcast %12 : vector<1x512xf32> to vector<8x512xf32>
    %c5 = arith.constant 5 : index
    %c0_7 = arith.constant 0 : index
    %14 = vector.load %arg2[%c5, %c0_7] : memref<9x512xf32, #tpu.memory_space<vmem>>, vector<1x512xf32>
    %15 = vector.shape_cast %14 : vector<1x512xf32> to vector<1x512xf32>
    %16 = vector.broadcast %15 : vector<1x512xf32> to vector<8x512xf32>
    %c6 = arith.constant 6 : index
    %c0_8 = arith.constant 0 : index
    %17 = vector.load %arg2[%c6, %c0_8] : memref<9x512xf32, #tpu.memory_space<vmem>>, vector<1x512xf32>
    %18 = vector.shape_cast %17 : vector<1x512xf32> to vector<1x512xf32>
    %19 = vector.broadcast %18 : vector<1x512xf32> to vector<8x512xf32>
    %c7 = arith.constant 7 : index
    %c0_9 = arith.constant 0 : index
    %20 = vector.load %arg2[%c7, %c0_9] : memref<9x512xf32, #tpu.memory_space<vmem>>, vector<1x512xf32>
    %21 = vector.shape_cast %20 : vector<1x512xf32> to vector<1x512xf32>
    %22 = vector.broadcast %21 : vector<1x512xf32> to vector<8x512xf32>
    %c8 = arith.constant 8 : index
    %c0_10 = arith.constant 0 : index
    %23 = vector.load %arg2[%c8, %c0_10] : memref<9x512xf32, #tpu.memory_space<vmem>>, vector<1x512xf32>
    %24 = vector.shape_cast %23 : vector<1x512xf32> to vector<1x512xf32>
    %25 = vector.broadcast %24 : vector<1x512xf32> to vector<8x512xf32>
    %c0_11 = arith.constant 0 : index
    %c0_12 = arith.constant 0 : index
    %26 = vector.load %arg3[%c0_11, %c0_12] : memref<8x72xbf16, #tpu.memory_space<vmem>>, vector<8x72xbf16>
    %c0_13 = arith.constant 0 : index
    %c0_14 = arith.constant 0 : index
    %27 = vector.load %arg4[%c0_13, %c0_14] : memref<8x72xbf16, #tpu.memory_space<vmem>>, vector<8x72xbf16>
    %c0_15 = arith.constant 0 : index
    %c0_16 = arith.constant 0 : index
    %28 = vector.load %arg5[%c0_15, %c0_16] : memref<8x1xf32, #tpu.memory_space<vmem>>, vector<8x1xf32>
    %c0_17 = arith.constant 0 : index
    %c0_18 = arith.constant 0 : index
    %29 = vector.load %arg6[%c0_17, %c0_18] : memref<8x1xf32, #tpu.memory_space<vmem>>, vector<8x1xf32>
    %c0_19 = arith.constant 0 : index
    %c0_20 = arith.constant 0 : index
    %30 = vector.load %arg7[%c0_19, %c0_20] : memref<8x1xf32, #tpu.memory_space<vmem>>, vector<8x1xf32>
    %c0_21 = arith.constant 0 : index
    %c0_22 = arith.constant 0 : index
    %31 = vector.load %arg8[%c0_21, %c0_22] : memref<8x1xf32, #tpu.memory_space<vmem>>, vector<8x1xf32>
    %c17_i32 = arith.constant 17 : i32
    %32 = tpu.dynamic_rotate %1 by %c17_i32 dim 1 : vector<8x512xf32>, i32 -> vector<8x512xf32>
    %33 = arith.mulf %32, %4 : vector<8x512xf32>
    %c16_i32 = arith.constant 16 : i32
    %34 = tpu.dynamic_rotate %1 by %c16_i32 dim 1 : vector<8x512xf32>, i32 -> vector<8x512xf32>
    %35 = arith.mulf %34, %7 : vector<8x512xf32>
    %c15_i32 = arith.constant 15 : i32
    %36 = tpu.dynamic_rotate %1 by %c15_i32 dim 1 : vector<8x512xf32>, i32 -> vector<8x512xf32>
    %37 = arith.mulf %36, %10 : vector<8x512xf32>
    %c1_i32 = arith.constant 1 : i32
    %38 = tpu.dynamic_rotate %1 by %c1_i32 dim 1 : vector<8x512xf32>, i32 -> vector<8x512xf32>
    %39 = arith.mulf %38, %13 : vector<8x512xf32>
    %c511_i32 = arith.constant 511 : i32
    %40 = tpu.dynamic_rotate %1 by %c511_i32 dim 1 : vector<8x512xf32>, i32 -> vector<8x512xf32>
    %41 = arith.mulf %40, %16 : vector<8x512xf32>
    %c497_i32 = arith.constant 497 : i32
    %42 = tpu.dynamic_rotate %1 by %c497_i32 dim 1 : vector<8x512xf32>, i32 -> vector<8x512xf32>
    %43 = arith.mulf %42, %19 : vector<8x512xf32>
    %c496_i32 = arith.constant 496 : i32
    %44 = tpu.dynamic_rotate %1 by %c496_i32 dim 1 : vector<8x512xf32>, i32 -> vector<8x512xf32>
    %45 = arith.mulf %44, %22 : vector<8x512xf32>
    %c495_i32 = arith.constant 495 : i32
    %46 = tpu.dynamic_rotate %1 by %c495_i32 dim 1 : vector<8x512xf32>, i32 -> vector<8x512xf32>
    %47 = arith.mulf %46, %25 : vector<8x512xf32>
    %48 = tpu.concatenate %33, %35, %37, %39, %1, %41, %43, %45, %47 in 0 : vector<8x512xf32>, vector<8x512xf32>, vector<8x512xf32>, vector<8x512xf32>, vector<8x512xf32>, vector<8x512xf32>, vector<8x512xf32>, vector<8x512xf32>, vector<8x512xf32> -> vector<72x512xf32>
    %49 = arith.truncf %48 : vector<72x512xf32> to vector<72x512xbf16>
    %cst = arith.constant dense<0.000000e+00> : vector<8x512xf32>
    %50 = tpu.matmul %26, %49, %cst {dimension_numbers = #tpu.dot_dimension_numbers<[1], [0], [0], [1], [0, 0, 1, 1], [], []>} : vector<8x72xbf16>, vector<72x512xbf16>, vector<8x512xf32> -> vector<8x512xf32>
    %51 = vector.broadcast %28 : vector<8x1xf32> to vector<8x512xf32>
    %52 = arith.mulf %50, %51 : vector<8x512xf32>
    %53 = vector.broadcast %29 : vector<8x1xf32> to vector<8x512xf32>
    %54 = arith.addf %52, %53 : vector<8x512xf32>
    %cst_23 = arith.constant 0.000000e+00 : f32
    %55 = vector.broadcast %cst_23 : f32 to vector<8x512xf32>
    %56 = arith.cmpf ogt, %54, %55 : vector<8x512xf32>
    %cst_24 = arith.constant 0.00999999977 : f32
    %57 = vector.broadcast %cst_24 : f32 to vector<8x512xf32>
    %58 = arith.mulf %57, %54 : vector<8x512xf32>
    %59 = arith.select %56, %54, %58 : vector<8x512xi1>, vector<8x512xf32>
    %c17_i32_25 = arith.constant 17 : i32
    %60 = tpu.dynamic_rotate %59 by %c17_i32_25 dim 1 : vector<8x512xf32>, i32 -> vector<8x512xf32>
    %61 = arith.mulf %60, %4 : vector<8x512xf32>
    %c16_i32_26 = arith.constant 16 : i32
    %62 = tpu.dynamic_rotate %59 by %c16_i32_26 dim 1 : vector<8x512xf32>, i32 -> vector<8x512xf32>
    %63 = arith.mulf %62, %7 : vector<8x512xf32>
    %c15_i32_27 = arith.constant 15 : i32
    %64 = tpu.dynamic_rotate %59 by %c15_i32_27 dim 1 : vector<8x512xf32>, i32 -> vector<8x512xf32>
    %65 = arith.mulf %64, %10 : vector<8x512xf32>
    %c1_i32_28 = arith.constant 1 : i32
    %66 = tpu.dynamic_rotate %59 by %c1_i32_28 dim 1 : vector<8x512xf32>, i32 -> vector<8x512xf32>
    %67 = arith.mulf %66, %13 : vector<8x512xf32>
    %c511_i32_29 = arith.constant 511 : i32
    %68 = tpu.dynamic_rotate %59 by %c511_i32_29 dim 1 : vector<8x512xf32>, i32 -> vector<8x512xf32>
    %69 = arith.mulf %68, %16 : vector<8x512xf32>
    %c497_i32_30 = arith.constant 497 : i32
    %70 = tpu.dynamic_rotate %59 by %c497_i32_30 dim 1 : vector<8x512xf32>, i32 -> vector<8x512xf32>
    %71 = arith.mulf %70, %19 : vector<8x512xf32>
    %c496_i32_31 = arith.constant 496 : i32
    %72 = tpu.dynamic_rotate %59 by %c496_i32_31 dim 1 : vector<8x512xf32>, i32 -> vector<8x512xf32>
    %73 = arith.mulf %72, %22 : vector<8x512xf32>
    %c495_i32_32 = arith.constant 495 : i32
    %74 = tpu.dynamic_rotate %59 by %c495_i32_32 dim 1 : vector<8x512xf32>, i32 -> vector<8x512xf32>
    %75 = arith.mulf %74, %25 : vector<8x512xf32>
    %76 = tpu.concatenate %61, %63, %65, %67, %59, %69, %71, %73, %75 in 0 : vector<8x512xf32>, vector<8x512xf32>, vector<8x512xf32>, vector<8x512xf32>, vector<8x512xf32>, vector<8x512xf32>, vector<8x512xf32>, vector<8x512xf32>, vector<8x512xf32> -> vector<72x512xf32>
    %77 = arith.truncf %76 : vector<72x512xf32> to vector<72x512xbf16>
    %cst_33 = arith.constant dense<0.000000e+00> : vector<8x512xf32>
    %78 = tpu.matmul %27, %77, %cst_33 {dimension_numbers = #tpu.dot_dimension_numbers<[1], [0], [0], [1], [0, 0, 1, 1], [], []>} : vector<8x72xbf16>, vector<72x512xbf16>, vector<8x512xf32> -> vector<8x512xf32>
    %79 = vector.broadcast %30 : vector<8x1xf32> to vector<8x512xf32>
    %80 = arith.mulf %78, %79 : vector<8x512xf32>
    %81 = vector.broadcast %31 : vector<8x1xf32> to vector<8x512xf32>
    %82 = arith.addf %80, %81 : vector<8x512xf32>
    %83 = arith.addf %82, %1 : vector<8x512xf32>
    %cst_34 = arith.constant 0.000000e+00 : f32
    %84 = vector.broadcast %cst_34 : f32 to vector<8x512xf32>
    %85 = arith.cmpf ogt, %83, %84 : vector<8x512xf32>
    %cst_35 = arith.constant 0.00999999977 : f32
    %86 = vector.broadcast %cst_35 : f32 to vector<8x512xf32>
    %87 = arith.mulf %86, %83 : vector<8x512xf32>
    %88 = arith.select %85, %83, %87 : vector<8x512xi1>, vector<8x512xf32>
    %c0_36 = arith.constant 0 : index
    %c0_37 = arith.constant 0 : index
    %c0_38 = arith.constant 0 : index
    %89 = vector.load %arg9[%c0_36, %c0_37, %c0_38] : memref<1x8x512xf32, #tpu.memory_space<vmem>>, vector<1x8x512xf32>
    %90 = vector.shape_cast %89 : vector<1x8x512xf32> to vector<8x512xf32>
    %91 = vector.shape_cast %88 : vector<8x512xf32> to vector<1x8x512xf32>
    tpu.vector_store %arg9[%c0_36, %c0_37, %c0_38], %91 {strides = array<i32>} : memref<1x8x512xf32, #tpu.memory_space<vmem>>, vector<1x8x512xf32>,
    return
  }
  func.func @transform_0(%arg0: i32) -> (i32, i32, i32) {
    %c0_i32 = arith.constant 0 : i32
    %c0_i32_0 = arith.constant 0 : i32
    %c0_i32_1 = arith.constant 0 : i32
    return %arg0, %c0_i32, %c0_i32_0 : i32, i32, i32
  }
  func.func @transform_1(%arg0: i32) -> (i32, i32) {
    %c0_i32 = arith.constant 0 : i32
    %c0_i32_0 = arith.constant 0 : i32
    %c0_i32_1 = arith.constant 0 : i32
    return %c0_i32, %c0_i32_0 : i32, i32
  }
  func.func @transform_2(%arg0: i32) -> (i32, i32) {
    %c0_i32 = arith.constant 0 : i32
    %c0_i32_0 = arith.constant 0 : i32
    %c0_i32_1 = arith.constant 0 : i32
    return %c0_i32, %c0_i32_0 : i32, i32
  }
  func.func @transform_3(%arg0: i32) -> (i32, i32) {
    %c0_i32 = arith.constant 0 : i32
    %c0_i32_0 = arith.constant 0 : i32
    %c0_i32_1 = arith.constant 0 : i32
    return %c0_i32, %c0_i32_0 : i32, i32
  }
  func.func @transform_4(%arg0: i32) -> (i32, i32) {
    %c0_i32 = arith.constant 0 : i32
    %c0_i32_0 = arith.constant 0 : i32
    %c0_i32_1 = arith.constant 0 : i32
    return %c0_i32, %c0_i32_0 : i32, i32
  }
  func.func @transform_5(%arg0: i32) -> (i32, i32) {
    %c0_i32 = arith.constant 0 : i32
    %c0_i32_0 = arith.constant 0 : i32
    %c0_i32_1 = arith.constant 0 : i32
    return %c0_i32, %c0_i32_0 : i32, i32
  }
  func.func @transform_6(%arg0: i32) -> (i32, i32) {
    %c0_i32 = arith.constant 0 : i32
    %c0_i32_0 = arith.constant 0 : i32
    %c0_i32_1 = arith.constant 0 : i32
    return %c0_i32, %c0_i32_0 : i32, i32
  }
  func.func @transform_7(%arg0: i32) -> (i32, i32) {
    %c0_i32 = arith.constant 0 : i32
    %c0_i32_0 = arith.constant 0 : i32
    %c0_i32_1 = arith.constant 0 : i32
    return %c0_i32, %c0_i32_0 : i32, i32
  }
  func.func @transform_8(%arg0: i32) -> (i32, i32, i32) {
    %c0_i32 = arith.constant 0 : i32
    %c0_i32_0 = arith.constant 0 : i32
    %c0_i32_1 = arith.constant 0 : i32
    return %arg0, %c0_i32, %c0_i32_0 : i32, i32, i32
  }
}

</mosaic_0001>

<llo_original>
// kernel: tpu_custom_call.1
$region0: #{tpu_custom_call.1}
  #allocation0 [shape = 'u32[]', space=smem, size = 0x4, offset = 0x4, fixed_abs, tag = 'smem constant byte address 0x4 - core index']
  #allocation1 [shape = 'u32[144,128]{1,0:T(1,128)}', space=vmem, size = 0x12000, scoped, tag = 'internal scratch']
  %s0 = inlined_call_operand.vmem [shape: f32[1,8,512], index: 0, kind: input, shape index: {}]
  %s1 = inlined_call_operand.hbm [shape: f32[9,512], index: 1, kind: input, shape index: {}]
  %s2 = inlined_call_operand.vmem [shape: bf16[8,72], index: 2, kind: input, shape index: {}]
  %s3 = inlined_call_operand.vmem [shape: bf16[8,72], index: 3, kind: input, shape index: {}]
  %s4 = inlined_call_operand.vmem [shape: f32[8,1], index: 4, kind: input, shape index: {}]
  %s5 = inlined_call_operand.vmem [shape: f32[8,1], index: 5, kind: input, shape index: {}]
  %s6 = inlined_call_operand.vmem [shape: f32[8,1], index: 6, kind: input, shape index: {}]
  %s7 = inlined_call_operand.vmem [shape: f32[8,1], index: 7, kind: input, shape index: {}]
  %s8 = inlined_call_operand.hbm [shape: f32[1,8,512], index: 8, kind: output, shape index: {}]
  %s9 = sld [smem:[#allocation0]]
  $region46: #{tpu_custom_call.1} parent=0
    _
  %s11 = ssub.s32 1, %s9
  %s12 = scalar_select 0, %s11, %s9
  $region1: #{tpu_custom_call.1} parent=0
    #allocation2 [shape = 'u8[32768]{0}', space=vmem, size = 0x8000, scoped, tag = 'input window, operand 1, single buffered']
    #allocation3 [shape = 's32[1]{0}', space=sflag, size = 0x4, scoped, tag = 'scoped memory for tpu_custom_call.1']
    #allocation4 [shape = 's32[1]{0}', space=sflag, size = 0x4, scoped, tag = 'scoped memory for tpu_custom_call.1']
    #allocation5 [shape = 'u8[16384]{0}', space=vmem, size = 0x4000, scoped, tag = 'output window, operand 0, single buffered']
    %13 = vsyncpa [#allocation3], 0
    %14 = vsyncpa [#allocation4], 0
    // Predicated region
    $region2: #{tpu_custom_call.1} parent=1 // pred_check
      _
    $region3: #{tpu_custom_call.1} parent=1 // pred_check_branch
      %16 = sbr.rel (0) target = $region5
    $region4: #{tpu_custom_call.1} parent=1 // pred_region
      _
    $region5: #{tpu_custom_call.1} parent=1 // pred_fallthru
      _
    // Predicated region
    $region6: #{tpu_custom_call.1} parent=1 // pred_check
      _
    $region7: #{tpu_custom_call.1} parent=1 // pred_check_branch
      %18 = sbr.rel (0) target = $region9
    $region8: #{tpu_custom_call.1} parent=1 // pred_region
      %s20 = ssub.s32 1024, 1024
      %21 = vsyncadd [#allocation3], %s20
      %s22 = sshll.u32 [#allocation2], 4
      %s23 = int_to_ptr.vmem [resolvable:$true] %s22
      %28 = dma.hbm_to_vmem [thread:$0]  %s1, 1024, %s23, [#allocation3], 512, 512, 32
    $region9: #{tpu_custom_call.1} parent=1 // pred_fallthru
      _
    // Predicated region
    $region10: #{tpu_custom_call.1} parent=1 // pred_check
      _
    $region11: #{tpu_custom_call.1} parent=1 // pred_check_branch
      %30 = sbr.rel (0) target = $region13
    $region12: #{tpu_custom_call.1} parent=1 // pred_region
      _
    $region13: #{tpu_custom_call.1} parent=1 // pred_fallthru
      _
    // Predicated region
    $region14: #{tpu_custom_call.1} parent=1 // pred_check
      _
    $region15: #{tpu_custom_call.1} parent=1 // pred_check_branch
      %32 = sbr.rel (0) target = $region17
    $region16: #{tpu_custom_call.1} parent=1 // pred_region
      _
    $region17: #{tpu_custom_call.1} parent=1 // pred_fallthru
      _
    // Predicated region
    $region18: #{tpu_custom_call.1} parent=1 // pred_check
      _
    $region19: #{tpu_custom_call.1} parent=1 // pred_check_branch
      %34 = sbr.rel (0) target = $region21
    $region20: #{tpu_custom_call.1} parent=1 // pred_region
      _
    $region21: #{tpu_custom_call.1} parent=1 // pred_fallthru
      _
    // Predicated region
    $region22: #{tpu_custom_call.1} parent=1 // pred_check
      _
    $region23: #{tpu_custom_call.1} parent=1 // pred_check_branch
      %36 = sbr.rel (0) target = $region25
    $region24: #{tpu_custom_call.1} parent=1 // pred_region
      _
    $region25: #{tpu_custom_call.1} parent=1 // pred_fallthru
      _
    // Predicated region
    $region26: #{tpu_custom_call.1} parent=1 // pred_check
      _
    $region27: #{tpu_custom_call.1} parent=1 // pred_check_branch
      %38 = sbr.rel (0) target = $region29
    $region28: #{tpu_custom_call.1} parent=1 // pred_region
      _
    $region29: #{tpu_custom_call.1} parent=1 // pred_fallthru
      _
    // Predicated region
    $region30: #{tpu_custom_call.1} parent=1 // pred_check
      _
    $region31: #{tpu_custom_call.1} parent=1 // pred_check_branch
      %40 = sbr.rel (0) target = $region33
    $region32: #{tpu_custom_call.1} parent=1 // pred_region
      _
    $region33: #{tpu_custom_call.1} parent=1 // pred_fallthru
      _
    // Predicated region
    $region34: #{tpu_custom_call.1} parent=1 // pred_check
      _
    $region35: #{tpu_custom_call.1} parent=1 // pred_check_branch
      %42 = sbr.rel (0) target = $region37
    $region36: #{tpu_custom_call.1} parent=1 // pred_region
      %43 = dma.done [#allocation3], 1024
    $region37: #{tpu_custom_call.1} parent=1 // pred_fallthru
      _
    %v45 = vld [vmem:[%s0] sm:$0xff]
    %v46 = vld [vmem:[%s0 + $0x8] sm:$0xff]
    %v47 = vld [vmem:[%s0 + $0x10] sm:$0xff]
    %v48 = vld [vmem:[%s0 + $0x18] sm:$0xff]
    %v49 = vld [vmem:[#allocation2] ss:$8 sm:$0xf]
    %v51 = vlaneseq
    %v52 = vshrl.u32 %v51, 7
    %v53 = vsub.s32 0, %v52
    %v54 = vrot.slane %v49, %v53
    %v55 = vlaneseq
    %v56 = vshrl.u32 %v55, 7
    %v57 = vsub.s32 1, %v56
    %v58 = vrot.slane %v49, %v57
    %v59 = vlaneseq
    %v60 = vshrl.u32 %v59, 7
    %v61 = vsub.s32 2, %v60
    %v62 = vrot.slane %v49, %v61
    %v63 = vlaneseq
    %v64 = vshrl.u32 %v63, 7
    %v65 = vsub.s32 3, %v64
    %v66 = vrot.slane %v49, %v65
    %s71 = scalar_lea.vmem [#allocation2], 1
    %v72 = vld [vmem:[%s71] ss:$8 sm:$0xf]
    %v74 = vlaneseq
    %v75 = vshrl.u32 %v74, 7
    %v76 = vsub.s32 0, %v75
    %v77 = vrot.slane %v72, %v76
    %v78 = vlaneseq
    %v79 = vshrl.u32 %v78, 7
    %v80 = vsub.s32 1, %v79
    %v81 = vrot.slane %v72, %v80
    %v82 = vlaneseq
    %v83 = vshrl.u32 %v82, 7
    %v84 = vsub.s32 2, %v83
    %v85 = vrot.slane %v72, %v84
    %v86 = vlaneseq
    %v87 = vshrl.u32 %v86, 7
    %v88 = vsub.s32 3, %v87
    %v89 = vrot.slane %v72, %v88
    %s94 = scalar_lea.vmem [#allocation2], 2
    %v95 = vld [vmem:[%s94] ss:$8 sm:$0xf]
    %v97 = vlaneseq
    %v98 = vshrl.u32 %v97, 7
    %v99 = vsub.s32 0, %v98
    %v100 = vrot.slane %v95, %v99
    %v101 = vlaneseq
    %v102 = vshrl.u32 %v101, 7
    %v103 = vsub.s32 1, %v102
    %v104 = vrot.slane %v95, %v103
    %v105 = vlaneseq
    %v106 = vshrl.u32 %v105, 7
    %v107 = vsub.s32 2, %v106
    %v108 = vrot.slane %v95, %v107
    %v109 = vlaneseq
    %v110 = vshrl.u32 %v109, 7
    %v111 = vsub.s32 3, %v110
    %v112 = vrot.slane %v95, %v111
    %s117 = scalar_lea.vmem [#allocation2], 3
    %v118 = vld [vmem:[%s117] ss:$8 sm:$0xf]
    %v120 = vlaneseq
    %v121 = vshrl.u32 %v120, 7
    %v122 = vsub.s32 0, %v121
    %v123 = vrot.slane %v118, %v122
    %v124 = vlaneseq
    %v125 = vshrl.u32 %v124, 7
    %v126 = vsub.s32 1, %v125
    %v127 = vrot.slane %v118, %v126
    %v128 = vlaneseq
    %v129 = vshrl.u32 %v128, 7
    %v130 = vsub.s32 2, %v129
    %v131 = vrot.slane %v118, %v130
    %v132 = vlaneseq
    %v133 = vshrl.u32 %v132, 7
    %v134 = vsub.s32 3, %v133
    %v135 = vrot.slane %v118, %v134
    %s140 = scalar_lea.vmem [#allocation2], 5
    %v141 = vld [vmem:[%s140] ss:$8 sm:$0xf]
    %v143 = vlaneseq
    %v144 = vshrl.u32 %v143, 7
    %v145 = vsub.s32 0, %v144
    %v146 = vrot.slane %v141, %v145
    %v147 = vlaneseq
    %v148 = vshrl.u32 %v147, 7
    %v149 = vsub.s32 1, %v148
    %v150 = vrot.slane %v141, %v149
    %v151 = vlaneseq
    %v152 = vshrl.u32 %v151, 7
    %v153 = vsub.s32 2, %v152
    %v154 = vrot.slane %v141, %v153
    %v155 = vlaneseq
    %v156 = vshrl.u32 %v155, 7
    %v157 = vsub.s32 3, %v156
    %v158 = vrot.slane %v141, %v157
    %s163 = scalar_lea.vmem [#allocation2], 6
    %v164 = vld [vmem:[%s163] ss:$8 sm:$0xf]
    %v166 = vlaneseq
    %v167 = vshrl.u32 %v166, 7
    %v168 = vsub.s32 0, %v167
    %v169 = vrot.slane %v164, %v168
    %v170 = vlaneseq
    %v171 = vshrl.u32 %v170, 7
    %v172 = vsub.s32 1, %v171
    %v173 = vrot.slane %v164, %v172
    %v174 = vlaneseq
    %v175 = vshrl.u32 %v174, 7
    %v176 = vsub.s32 2, %v175
    %v177 = vrot.slane %v164, %v176
    %v178 = vlaneseq
    %v179 = vshrl.u32 %v178, 7
    %v180 = vsub.s32 3, %v179
    %v181 = vrot.slane %v164, %v180
    %s186 = scalar_lea.vmem [#allocation2], 7
    %v187 = vld [vmem:[%s186] ss:$8 sm:$0xf]
    %v189 = vlaneseq
    %v190 = vshrl.u32 %v189, 7
    %v191 = vsub.s32 0, %v190
    %v192 = vrot.slane %v187, %v191
    %v193 = vlaneseq
    %v194 = vshrl.u32 %v193, 7
    %v195 = vsub.s32 1, %v194
    %v196 = vrot.slane %v187, %v195
    %v197 = vlaneseq
    %v198 = vshrl.u32 %v197, 7
    %v199 = vsub.s32 2, %v198
    %v200 = vrot.slane %v187, %v199
    %v201 = vlaneseq
    %v202 = vshrl.u32 %v201, 7
    %v203 = vsub.s32 3, %v202
    %v204 = vrot.slane %v187, %v203
    %s209 = scalar_lea.vmem [#allocation2], 32
    %v210 = vld [vmem:[%s209] ss:$8 sm:$0xf]
    %v212 = vlaneseq
    %v213 = vshrl.u32 %v212, 7
    %v214 = vsub.s32 0, %v213
    %v215 = vrot.slane %v210, %v214
    %v216 = vlaneseq
    %v217 = vshrl.u32 %v216, 7
    %v218 = vsub.s32 1, %v217
    %v219 = vrot.slane %v210, %v218
    %v220 = vlaneseq
    %v221 = vshrl.u32 %v220, 7
    %v222 = vsub.s32 2, %v221
    %v223 = vrot.slane %v210, %v222
    %v224 = vlaneseq
    %v225 = vshrl.u32 %v224, 7
    %v226 = vsub.s32 3, %v225
    %v227 = vrot.slane %v210, %v226
    %v232 = vld [vmem:[%s2] sm:$0xf]
    %v233 = vld [vmem:[%s3] sm:$0xf]
    %v234 = vld [vmem:[%s4] sm:$0xff]
    %v235 = vld [vmem:[%s5] sm:$0xff]
    %v236 = vld [vmem:[%s6] sm:$0xff]
    %v237 = vld [vmem:[%s7] sm:$0xff]
    %238 = vrot.lane.b32.xlu0 %v45, 17
    %v239 = vpop.permute.xlu0 %238
    %240 = vrot.lane.b32.xlu0 %v46, 17
    %v241 = vpop.permute.xlu0 %240
    %242 = vrot.lane.b32.xlu0 %v47, 17
    %v243 = vpop.permute.xlu0 %242
    %244 = vrot.lane.b32.xlu0 %v48, 17
    %v245 = vpop.permute.xlu0 %244
    %v246 = vlaneseq
    %v247 = vand.u32 %v246, 127
    %vm248 = vcmp.lt.s32.totalorder %v247, 17
    %v249 = vsel %vm248, %v243, %v245
    %v250 = vsel %vm248, %v241, %v243
    %v251 = vsel %vm248, %v239, %v241
    %v252 = vsel %vm248, %v245, %v239
    %v253 = vmul.f32 %v252, %v54
    %v254 = vmul.f32 %v251, %v58
    %v255 = vmul.f32 %v250, %v62
    %v256 = vmul.f32 %v249, %v66
    %257 = vrot.lane.b32.xlu0 %v45, 16
    %v258 = vpop.permute.xlu0 %257
    %259 = vrot.lane.b32.xlu0 %v46, 16
    %v260 = vpop.permute.xlu0 %259
    %261 = vrot.lane.b32.xlu0 %v47, 16
    %v262 = vpop.permute.xlu0 %261
    %263 = vrot.lane.b32.xlu0 %v48, 16
    %v264 = vpop.permute.xlu0 %263
    %vm265 = vcmp.lt.s32.totalorder %v247, 16
    %v266 = vsel %vm265, %v262, %v264
    %v267 = vsel %vm265, %v260, %v262
    %v268 = vsel %vm265, %v258, %v260
    %v269 = vsel %vm265, %v264, %v258
    %v270 = vmul.f32 %v269, %v77
    %v271 = vmul.f32 %v268, %v81
    %v272 = vmul.f32 %v267, %v85
    %v273 = vmul.f32 %v266, %v89
    %274 = vrot.lane.b32.xlu0 %v45, 15
    %v275 = vpop.permute.xlu0 %274
    %276 = vrot.lane.b32.xlu0 %v46, 15
    %v277 = vpop.permute.xlu0 %276
    %278 = vrot.lane.b32.xlu0 %v47, 15
    %v279 = vpop.permute.xlu0 %278
    %280 = vrot.lane.b32.xlu0 %v48, 15
    %v281 = vpop.permute.xlu0 %280
    %vm282 = vcmp.lt.s32.totalorder %v247, 15
    %v283 = vsel %vm282, %v279, %v281
    %v284 = vsel %vm282, %v277, %v279
    %v285 = vsel %vm282, %v275, %v277
    %v286 = vsel %vm282, %v281, %v275
    %v287 = vmul.f32 %v286, %v100
    %v288 = vmul.f32 %v285, %v104
    %v289 = vmul.f32 %v284, %v108
    %v290 = vmul.f32 %v283, %v112
    %291 = vrot.lane.b32.xlu0 %v45, 1
    %v292 = vpop.permute.xlu0 %291
    %293 = vrot.lane.b32.xlu0 %v46, 1
    %v294 = vpop.permute.xlu0 %293
    %295 = vrot.lane.b32.xlu0 %v47, 1
    %v296 = vpop.permute.xlu0 %295
    %297 = vrot.lane.b32.xlu0 %v48, 1
    %v298 = vpop.permute.xlu0 %297
    %vm299 = vcmp.lt.s32.totalorder %v247, 1
    %v300 = vsel %vm299, %v296, %v298
    %v301 = vsel %vm299, %v294, %v296
    %v302 = vsel %vm299, %v292, %v294
    %v303 = vsel %vm299, %v298, %v292
    %v304 = vmul.f32 %v303, %v123
    %v305 = vmul.f32 %v302, %v127
    %v306 = vmul.f32 %v301, %v131
    %v307 = vmul.f32 %v300, %v135
    %308 = vrot.lane.b32.xlu0 %v45, 127
    %v309 = vpop.permute.xlu0 %308
    %310 = vrot.lane.b32.xlu0 %v46, 127
    %v311 = vpop.permute.xlu0 %310
    %312 = vrot.lane.b32.xlu0 %v47, 127
    %v313 = vpop.permute.xlu0 %312
    %314 = vrot.lane.b32.xlu0 %v48, 127
    %v315 = vpop.permute.xlu0 %314
    %vm316 = vcmp.lt.s32.totalorder %v247, 127
    %v317 = vsel %vm316, %v313, %v315
    %v318 = vsel %vm316, %v311, %v313
    %v319 = vsel %vm316, %v309, %v311
    %v320 = vsel %vm316, %v315, %v309
    %v321 = vmul.f32 %v319, %v146
    %v322 = vmul.f32 %v318, %v150
    %v323 = vmul.f32 %v317, %v154
    %v324 = vmul.f32 %v320, %v158
    %325 = vrot.lane.b32.xlu0 %v45, 113
    %v326 = vpop.permute.xlu0 %325
    %327 = vrot.lane.b32.xlu0 %v46, 113
    %v328 = vpop.permute.xlu0 %327
    %329 = vrot.lane.b32.xlu0 %v47, 113
    %v330 = vpop.permute.xlu0 %329
    %331 = vrot.lane.b32.xlu0 %v48, 113
    %v332 = vpop.permute.xlu0 %331
    %vm333 = vcmp.lt.s32.totalorder %v247, 113
    %v334 = vsel %vm333, %v330, %v332
    %v335 = vsel %vm333, %v328, %v330
    %v336 = vsel %vm333, %v326, %v328
    %v337 = vsel %vm333, %v332, %v326
    %v338 = vmul.f32 %v336, %v169
    %v339 = vmul.f32 %v335, %v173
    %v340 = vmul.f32 %v334, %v177
    %v341 = vmul.f32 %v337, %v181
    %342 = vrot.lane.b32.xlu0 %v45, 112
    %v343 = vpop.permute.xlu0 %342
    %344 = vrot.lane.b32.xlu0 %v46, 112
    %v345 = vpop.permute.xlu0 %344
    %346 = vrot.lane.b32.xlu0 %v47, 112
    %v347 = vpop.permute.xlu0 %346
    %348 = vrot.lane.b32.xlu0 %v48, 112
    %v349 = vpop.permute.xlu0 %348
    %vm350 = vcmp.lt.s32.totalorder %v247, 112
    %v351 = vsel %vm350, %v347, %v349
    %v352 = vsel %vm350, %v345, %v347
    %v353 = vsel %vm350, %v343, %v345
    %v354 = vsel %vm350, %v349, %v343
    %v355 = vmul.f32 %v353, %v192
    %v356 = vmul.f32 %v352, %v196
    %v357 = vmul.f32 %v351, %v200
    %v358 = vmul.f32 %v354, %v204
    %359 = vrot.lane.b32.xlu0 %v45, 111
    %v360 = vpop.permute.xlu0 %359
    %361 = vrot.lane.b32.xlu0 %v46, 111
    %v362 = vpop.permute.xlu0 %361
    %363 = vrot.lane.b32.xlu0 %v47, 111
    %v364 = vpop.permute.xlu0 %363
    %365 = vrot.lane.b32.xlu0 %v48, 111
    %v366 = vpop.permute.xlu0 %365
    %vm367 = vcmp.lt.s32.totalorder %v247, 111
    %v368 = vsel %vm367, %v364, %v366
    %v369 = vsel %vm367, %v362, %v364
    %v370 = vsel %vm367, %v360, %v362
    %v371 = vsel %vm367, %v366, %v360
    %v372 = vmul.f32 %v370, %v215
    %v373 = vmul.f32 %v369, %v219
    %v374 = vmul.f32 %v368, %v223
    %v375 = vmul.f32 %v371, %v227
    %v376 = vpack.c.bf16 %v270, %v253
    %v377 = vpack.c.bf16 %v271, %v254
    %v378 = vpack.c.bf16 %v272, %v255
    %v379 = vpack.c.bf16 %v273, %v256
    %v380 = vpack.c.bf16 %v304, %v287
    %v381 = vpack.c.bf16 %v305, %v288
    %v382 = vpack.c.bf16 %v306, %v289
    %v383 = vpack.c.bf16 %v307, %v290
    %v384 = vpack.c.bf16 %v321, %v45
    %v385 = vpack.c.bf16 %v322, %v46
    %v386 = vpack.c.bf16 %v323, %v47
    %v387 = vpack.c.bf16 %v324, %v48
    %v388 = vpack.c.bf16 %v355, %v338
    %v389 = vpack.c.bf16 %v356, %v339
    %v390 = vpack.c.bf16 %v357, %v340
    %v391 = vpack.c.bf16 %v358, %v341
    %v392 = vpack.c.bf16 %v372, %v372
    %v393 = vpack.c.bf16 %v373, %v373
    %v394 = vpack.c.bf16 %v374, %v374
    %v395 = vpack.c.bf16 %v375, %v375
    %vm396 = vcmask 588800
    %v398 = vsel %vm396, %v232, 0
    %vm400 = vcmask 1043456
    %v402 = vsel %vm400, %v392, 0
    %v405 = vsel %vm400, %v393, 0
    %v408 = vsel %vm400, %v394, 0
    %v411 = vsel %vm400, %v395, 0
    %413 = vmatprep.subr.bf16.mxu0 0
    %414 = vmatpush1.bf16.msra.mxu0 0
    %415 = vmatprep.subr.bf16.mxu0 0
    %416 = vmatpush1.bf16.msra.mxu0 0
    %417 = vmatprep.subr.bf16.mxu0 0
    %418 = vmatpush1.bf16.msra.mxu0 0
    %419 = vmatprep.subr.bf16.mxu0 %v405
    %420 = vmatpush1.bf16.msra.mxu0 %v402
    %421 = vmatprep.subr.bf16.mxu0 %v389
    %422 = vmatpush1.bf16.msra.mxu0 %v388
    %423 = vmatprep.subr.bf16.mxu0 %v385
    %424 = vmatpush1.bf16.msra.mxu0 %v384
    %425 = vmatprep.subr.bf16.mxu0 %v381
    %426 = vmatpush1.bf16.msra.mxu0 %v380
    %427 = vmatprep.subr.bf16.mxu0 %v377
    %428 = vmatpush1.bf16.msra.mxu0 %v376
    %429 = vmatprep.subr.bf16.mxu0 0
    %430 = vmatpush2.bf16.msra.mxu0 0
    %431 = vmatprep.subr.bf16.mxu0 0
    %432 = vmatpush2.bf16.msra.mxu0 0
    %433 = vmatprep.subr.bf16.mxu0 0
    %434 = vmatpush2.bf16.msra.mxu0 0
    %435 = vmatprep.subr.bf16.mxu0 0
    %436 = vmatpush2.bf16.msra.mxu0 0
    %437 = vmatprep.subr.bf16.mxu0 0
    %438 = vmatpush2.bf16.msra.mxu0 0
    %439 = vmatprep.subr.bf16.mxu0 0
    %440 = vmatpush2.bf16.msra.mxu0 0
    %441 = vmatprep.subr.bf16.mxu0 0
    %442 = vmatpush2.bf16.msra.mxu0 0
    %443 = vmatprep.subr.bf16.mxu0 0
    %444 = vmatpush2.bf16.msra.mxu0 0
    %445 = vmatprep.mubr.bf16.mxu0 0
    %446 = vmatmul.mubr.bf16.gmra.mxu0 %v398
    %v447 = vpop.f32.mrf.mxu0
    %v448 = vadd.f32 0.0, %v447
    %v449 = vpop.f32.mrf.mxu0
    %v450 = vadd.f32 0.0, %v449
    %v451 = vpop.f32.mrf.mxu0
    %v452 = vpop.f32.mrf.mxu0
    %453 = vdwg.mxu0
    %454 = vmatprep.subr.bf16.mxu0 0
    %455 = vmatpush1.bf16.msra.mxu0 0
    %456 = vmatprep.subr.bf16.mxu0 0
    %457 = vmatpush1.bf16.msra.mxu0 0
    %458 = vmatprep.subr.bf16.mxu0 0
    %459 = vmatpush1.bf16.msra.mxu0 0
    %460 = vmatprep.subr.bf16.mxu0 %v411
    %461 = vmatpush1.bf16.msra.mxu0 %v408
    %462 = vmatprep.subr.bf16.mxu0 %v391
    %463 = vmatpush1.bf16.msra.mxu0 %v390
    %464 = vmatprep.subr.bf16.mxu0 %v387
    %465 = vmatpush1.bf16.msra.mxu0 %v386
    %466 = vmatprep.subr.bf16.mxu0 %v383
    %467 = vmatpush1.bf16.msra.mxu0 %v382
    %468 = vmatprep.subr.bf16.mxu0 %v379
    %469 = vmatpush1.bf16.msra.mxu0 %v378
    %470 = vmatprep.subr.bf16.mxu0 0
    %471 = vmatpush2.bf16.msra.mxu0 0
    %472 = vmatprep.subr.bf16.mxu0 0
    %473 = vmatpush2.bf16.msra.mxu0 0
    %474 = vmatprep.subr.bf16.mxu0 0
    %475 = vmatpush2.bf16.msra.mxu0 0
    %476 = vmatprep.subr.bf16.mxu0 0
    %477 = vmatpush2.bf16.msra.mxu0 0
    %478 = vmatprep.subr.bf16.mxu0 0
    %479 = vmatpush2.bf16.msra.mxu0 0
    %480 = vmatprep.subr.bf16.mxu0 0
    %481 = vmatpush2.bf16.msra.mxu0 0
    %482 = vmatprep.subr.bf16.mxu0 0
    %483 = vmatpush2.bf16.msra.mxu0 0
    %484 = vmatprep.subr.bf16.mxu0 0
    %485 = vmatpush2.bf16.msra.mxu0 0
    %486 = vmatprep.mubr.bf16.mxu0 0
    %487 = vmatmul.mubr.bf16.gmra.mxu0 %v398
    %v488 = vpop.f32.mrf.mxu0
    %v489 = vadd.f32 0.0, %v488
    %v490 = vpop.f32.mrf.mxu0
    %v491 = vadd.f32 0.0, %v490
    %v492 = vpop.f32.mrf.mxu0
    %v493 = vpop.f32.mrf.mxu0
    %494 = vdwg.mxu0
    %496 = vset.pattern.permute.xlu0 0
    %497 = vperm.xlu0 %496, %v234
    %v498 = vpop.permute.xlu0 %497
    %v500 = vmul.f32 %v448, %v498
    %v501 = vmul.f32 %v450, %v498
    %v502 = vmul.f32 %v489, %v498
    %v503 = vmul.f32 %v491, %v498
    %505 = vset.pattern.permute.xlu0 0
    %506 = vperm.xlu0 %505, %v235
    %v507 = vpop.permute.xlu0 %506
    %v509 = vadd.f32 %v500, %v507
    %v510 = vadd.f32 %v501, %v507
    %v511 = vadd.f32 %v502, %v507
    %v512 = vadd.f32 %v503, %v507
    %vm513 = vcmp.gt.f32.partialorder %v509, 0.0
    %vm514 = vcmp.gt.f32.partialorder %v510, 0.0
    %vm515 = vcmp.gt.f32.partialorder %v511, 0.0
    %vm516 = vcmp.gt.f32.partialorder %v512, 0.0
    %v517 = vmul.f32 %v509, 0.01
    %v518 = vmul.f32 %v510, 0.01
    %v519 = vmul.f32 %v511, 0.01
    %v520 = vmul.f32 %v512, 0.01
    %v521 = vsel %vm513, %v509, %v517
    %v522 = vsel %vm514, %v510, %v518
    %v523 = vsel %vm515, %v511, %v519
    %v524 = vsel %vm516, %v512, %v520
    %525 = vrot.lane.b32.xlu0 %v521, 17
    %v526 = vpop.permute.xlu0 %525
    %527 = vrot.lane.b32.xlu0 %v522, 17
    %v528 = vpop.permute.xlu0 %527
    %529 = vrot.lane.b32.xlu0 %v523, 17
    %v530 = vpop.permute.xlu0 %529
    %531 = vrot.lane.b32.xlu0 %v524, 17
    %v532 = vpop.permute.xlu0 %531
    %v533 = vsel %vm248, %v530, %v532
    %v534 = vsel %vm248, %v528, %v530
    %v535 = vsel %vm248, %v526, %v528
    %v536 = vsel %vm248, %v532, %v526
    %v537 = vmul.f32 %v536, %v54
    %v538 = vmul.f32 %v535, %v58
    %v539 = vmul.f32 %v534, %v62
    %v540 = vmul.f32 %v533, %v66
    %541 = vrot.lane.b32.xlu0 %v521, 16
    %v542 = vpop.permute.xlu0 %541
    %543 = vrot.lane.b32.xlu0 %v522, 16
    %v544 = vpop.permute.xlu0 %543
    %545 = vrot.lane.b32.xlu0 %v523, 16
    %v546 = vpop.permute.xlu0 %545
    %547 = vrot.lane.b32.xlu0 %v524, 16
    %v548 = vpop.permute.xlu0 %547
    %v549 = vsel %vm265, %v546, %v548
    %v550 = vsel %vm265, %v544, %v546
    %v551 = vsel %vm265, %v542, %v544
    %v552 = vsel %vm265, %v548, %v542
    %v553 = vmul.f32 %v552, %v77
    %v554 = vmul.f32 %v551, %v81
    %v555 = vmul.f32 %v550, %v85
    %v556 = vmul.f32 %v549, %v89
    %557 = vrot.lane.b32.xlu0 %v521, 15
    %v558 = vpop.permute.xlu0 %557
    %559 = vrot.lane.b32.xlu0 %v522, 15
    %v560 = vpop.permute.xlu0 %559
    %561 = vrot.lane.b32.xlu0 %v523, 15
    %v562 = vpop.permute.xlu0 %561
    %563 = vrot.lane.b32.xlu0 %v524, 15
    %v564 = vpop.permute.xlu0 %563
    %v565 = vsel %vm282, %v562, %v564
    %v566 = vsel %vm282, %v560, %v562
    %v567 = vsel %vm282, %v558, %v560
    %v568 = vsel %vm282, %v564, %v558
    %v569 = vmul.f32 %v568, %v100
    %v570 = vmul.f32 %v567, %v104
    %v571 = vmul.f32 %v566, %v108
    %v572 = vmul.f32 %v565, %v112
    %573 = vrot.lane.b32.xlu0 %v521, 1
    %v574 = vpop.permute.xlu0 %573
    %575 = vrot.lane.b32.xlu0 %v522, 1
    %v576 = vpop.permute.xlu0 %575
    %577 = vrot.lane.b32.xlu0 %v523, 1
    %v578 = vpop.permute.xlu0 %577
    %579 = vrot.lane.b32.xlu0 %v524, 1
    %v580 = vpop.permute.xlu0 %579
    %v581 = vsel %vm299, %v578, %v580
    %v582 = vsel %vm299, %v576, %v578
    %v583 = vsel %vm299, %v574, %v576
    %v584 = vsel %vm299, %v580, %v574
    %v585 = vmul.f32 %v584, %v123
    %v586 = vmul.f32 %v583, %v127
    %v587 = vmul.f32 %v582, %v131
    %v588 = vmul.f32 %v581, %v135
    %589 = vrot.lane.b32.xlu0 %v521, 127
    %v590 = vpop.permute.xlu0 %589
    %591 = vrot.lane.b32.xlu0 %v522, 127
    %v592 = vpop.permute.xlu0 %591
    %593 = vrot.lane.b32.xlu0 %v523, 127
    %v594 = vpop.permute.xlu0 %593
    %595 = vrot.lane.b32.xlu0 %v524, 127
    %v596 = vpop.permute.xlu0 %595
    %v597 = vsel %vm316, %v594, %v596
    %v598 = vsel %vm316, %v592, %v594
    %v599 = vsel %vm316, %v590, %v592
    %v600 = vsel %vm316, %v596, %v590
    %v601 = vmul.f32 %v599, %v146
    %v602 = vmul.f32 %v598, %v150
    %v603 = vmul.f32 %v597, %v154
    %v604 = vmul.f32 %v600, %v158
    %605 = vrot.lane.b32.xlu0 %v521, 113
    %v606 = vpop.permute.xlu0 %605
    %607 = vrot.lane.b32.xlu0 %v522, 113
    %v608 = vpop.permute.xlu0 %607
    %609 = vrot.lane.b32.xlu0 %v523, 113
    %v610 = vpop.permute.xlu0 %609
    %611 = vrot.lane.b32.xlu0 %v524, 113
    %v612 = vpop.permute.xlu0 %611
    %v613 = vsel %vm333, %v610, %v612
    %v614 = vsel %vm333, %v608, %v610
    %v615 = vsel %vm333, %v606, %v608
    %v616 = vsel %vm333, %v612, %v606
    %v617 = vmul.f32 %v615, %v169
    %v618 = vmul.f32 %v614, %v173
    %v619 = vmul.f32 %v613, %v177
    %v620 = vmul.f32 %v616, %v181
    %621 = vrot.lane.b32.xlu0 %v521, 112
    %v622 = vpop.permute.xlu0 %621
    %623 = vrot.lane.b32.xlu0 %v522, 112
    %v624 = vpop.permute.xlu0 %623
    %625 = vrot.lane.b32.xlu0 %v523, 112
    %v626 = vpop.permute.xlu0 %625
    %627 = vrot.lane.b32.xlu0 %v524, 112
    %v628 = vpop.permute.xlu0 %627
    %v629 = vsel %vm350, %v626, %v628
    %v630 = vsel %vm350, %v624, %v626
    %v631 = vsel %vm350, %v622, %v624
    %v632 = vsel %vm350, %v628, %v622
    %v633 = vmul.f32 %v631, %v192
    %v634 = vmul.f32 %v630, %v196
    %v635 = vmul.f32 %v629, %v200
    %v636 = vmul.f32 %v632, %v204
    %637 = vrot.lane.b32.xlu0 %v521, 111
    %v638 = vpop.permute.xlu0 %637
    %639 = vrot.lane.b32.xlu0 %v522, 111
    %v640 = vpop.permute.xlu0 %639
    %641 = vrot.lane.b32.xlu0 %v523, 111
    %v642 = vpop.permute.xlu0 %641
    %643 = vrot.lane.b32.xlu0 %v524, 111
    %v644 = vpop.permute.xlu0 %643
    %v645 = vsel %vm367, %v642, %v644
    %v646 = vsel %vm367, %v640, %v642
    %v647 = vsel %vm367, %v638, %v640
    %v648 = vsel %vm367, %v644, %v638
    %v649 = vmul.f32 %v647, %v215
    %v650 = vmul.f32 %v646, %v219
    %v651 = vmul.f32 %v645, %v223
    %v652 = vmul.f32 %v648, %v227
    %v653 = vpack.c.bf16 %v553, %v537
    %v654 = vpack.c.bf16 %v554, %v538
    %v655 = vpack.c.bf16 %v555, %v539
    %v656 = vpack.c.bf16 %v556, %v540
    %v657 = vpack.c.bf16 %v585, %v569
    %v658 = vpack.c.bf16 %v586, %v570
    %v659 = vpack.c.bf16 %v587, %v571
    %v660 = vpack.c.bf16 %v588, %v572
    %v661 = vpack.c.bf16 %v601, %v521
    %v662 = vpack.c.bf16 %v602, %v522
    %v663 = vpack.c.bf16 %v603, %v523
    %v664 = vpack.c.bf16 %v604, %v524
    %v665 = vpack.c.bf16 %v633, %v617
    %v666 = vpack.c.bf16 %v634, %v618
    %v667 = vpack.c.bf16 %v635, %v619
    %v668 = vpack.c.bf16 %v636, %v620
    %v669 = vpack.c.bf16 %v649, %v649
    %v670 = vpack.c.bf16 %v650, %v650
    %v671 = vpack.c.bf16 %v651, %v651
    %v672 = vpack.c.bf16 %v652, %v652
    %v674 = vsel %vm396, %v233, 0
    %v677 = vsel %vm400, %v669, 0
    %v680 = vsel %vm400, %v670, 0
    %v683 = vsel %vm400, %v671, 0
    %v686 = vsel %vm400, %v672, 0
    %688 = vmatprep.subr.bf16.mxu0 0
    %689 = vmatpush1.bf16.msra.mxu0 0
    %690 = vmatprep.subr.bf16.mxu0 0
    %691 = vmatpush1.bf16.msra.mxu0 0
    %692 = vmatprep.subr.bf16.mxu0 0
    %693 = vmatpush1.bf16.msra.mxu0 0
    %694 = vmatprep.subr.bf16.mxu0 %v680
    %695 = vmatpush1.bf16.msra.mxu0 %v677
    %696 = vmatprep.subr.bf16.mxu0 %v666
    %697 = vmatpush1.bf16.msra.mxu0 %v665
    %698 = vmatprep.subr.bf16.mxu0 %v662
    %699 = vmatpush1.bf16.msra.mxu0 %v661
    %700 = vmatprep.subr.bf16.mxu0 %v658
    %701 = vmatpush1.bf16.msra.mxu0 %v657
    %702 = vmatprep.subr.bf16.mxu0 %v654
    %703 = vmatpush1.bf16.msra.mxu0 %v653
    %704 = vmatprep.subr.bf16.mxu0 0
    %705 = vmatpush2.bf16.msra.mxu0 0
    %706 = vmatprep.subr.bf16.mxu0 0
    %707 = vmatpush2.bf16.msra.mxu0 0
    %708 = vmatprep.subr.bf16.mxu0 0
    %709 = vmatpush2.bf16.msra.mxu0 0
    %710 = vmatprep.subr.bf16.mxu0 0
    %711 = vmatpush2.bf16.msra.mxu0 0
    %712 = vmatprep.subr.bf16.mxu0 0
    %713 = vmatpush2.bf16.msra.mxu0 0
    %714 = vmatprep.subr.bf16.mxu0 0
    %715 = vmatpush2.bf16.msra.mxu0 0
    %716 = vmatprep.subr.bf16.mxu0 0
    %717 = vmatpush2.bf16.msra.mxu0 0
    %718 = vmatprep.subr.bf16.mxu0 0
    %719 = vmatpush2.bf16.msra.mxu0 0
    %720 = vmatprep.mubr.bf16.mxu0 0
    %721 = vmatmul.mubr.bf16.gmra.mxu0 %v674
    %v722 = vpop.f32.mrf.mxu0
    %v723 = vadd.f32 0.0, %v722
    %v724 = vpop.f32.mrf.mxu0
    %v725 = vadd.f32 0.0, %v724
    %v726 = vpop.f32.mrf.mxu0
    %v727 = vpop.f32.mrf.mxu0
    %728 = vdwg.mxu0
    %729 = vmatprep.subr.bf16.mxu0 0
    %730 = vmatpush1.bf16.msra.mxu0 0
    %731 = vmatprep.subr.bf16.mxu0 0
    %732 = vmatpush1.bf16.msra.mxu0 0
    %733 = vmatprep.subr.bf16.mxu0 0
    %734 = vmatpush1.bf16.msra.mxu0 0
    %735 = vmatprep.subr.bf16.mxu0 %v686
    %736 = vmatpush1.bf16.msra.mxu0 %v683
    %737 = vmatprep.subr.bf16.mxu0 %v668
    %738 = vmatpush1.bf16.msra.mxu0 %v667
    %739 = vmatprep.subr.bf16.mxu0 %v664
    %740 = vmatpush1.bf16.msra.mxu0 %v663
    %741 = vmatprep.subr.bf16.mxu0 %v660
    %742 = vmatpush1.bf16.msra.mxu0 %v659
    %743 = vmatprep.subr.bf16.mxu0 %v656
    %744 = vmatpush1.bf16.msra.mxu0 %v655
    %745 = vmatprep.subr.bf16.mxu0 0
    %746 = vmatpush2.bf16.msra.mxu0 0
    %747 = vmatprep.subr.bf16.mxu0 0
    %748 = vmatpush2.bf16.msra.mxu0 0
    %749 = vmatprep.subr.bf16.mxu0 0
    %750 = vmatpush2.bf16.msra.mxu0 0
    %751 = vmatprep.subr.bf16.mxu0 0
    %752 = vmatpush2.bf16.msra.mxu0 0
    %753 = vmatprep.subr.bf16.mxu0 0
    %754 = vmatpush2.bf16.msra.mxu0 0
    %755 = vmatprep.subr.bf16.mxu0 0
    %756 = vmatpush2.bf16.msra.mxu0 0
    %757 = vmatprep.subr.bf16.mxu0 0
    %758 = vmatpush2.bf16.msra.mxu0 0
    %759 = vmatprep.subr.bf16.mxu0 0
    %760 = vmatpush2.bf16.msra.mxu0 0
    %761 = vmatprep.mubr.bf16.mxu0 0
    %762 = vmatmul.mubr.bf16.gmra.mxu0 %v674
    %v763 = vpop.f32.mrf.mxu0
    %v764 = vadd.f32 0.0, %v763
    %v765 = vpop.f32.mrf.mxu0
    %v766 = vadd.f32 0.0, %v765
    %v767 = vpop.f32.mrf.mxu0
    %v768 = vpop.f32.mrf.mxu0
    %769 = vdwg.mxu0
    %771 = vset.pattern.permute.xlu0 0
    %772 = vperm.xlu0 %771, %v236
    %v773 = vpop.permute.xlu0 %772
    %v775 = vmul.f32 %v723, %v773
    %v776 = vmul.f32 %v725, %v773
    %v777 = vmul.f32 %v764, %v773
    %v778 = vmul.f32 %v766, %v773
    %780 = vset.pattern.permute.xlu0 0
    %781 = vperm.xlu0 %780, %v237
    %v782 = vpop.permute.xlu0 %781
    %v784 = vadd.f32 %v775, %v782
    %v785 = vadd.f32 %v776, %v782
    %v786 = vadd.f32 %v777, %v782
    %v787 = vadd.f32 %v778, %v782
    %v788 = vadd.f32 %v784, %v45
    %v789 = vadd.f32 %v785, %v46
    %v790 = vadd.f32 %v786, %v47
    %v791 = vadd.f32 %v787, %v48
    %vm792 = vcmp.gt.f32.partialorder %v788, 0.0
    %vm793 = vcmp.gt.f32.partialorder %v789, 0.0
    %vm794 = vcmp.gt.f32.partialorder %v790, 0.0
    %vm795 = vcmp.gt.f32.partialorder %v791, 0.0
    %v796 = vmul.f32 %v788, 0.01
    %v797 = vmul.f32 %v789, 0.01
    %v798 = vmul.f32 %v790, 0.01
    %v799 = vmul.f32 %v791, 0.01
    %v800 = vsel %vm792, %v788, %v796
    %v801 = vsel %vm793, %v789, %v797
    %v802 = vsel %vm794, %v790, %v798
    %v803 = vsel %vm795, %v791, %v799
    %804 = vst [vmem:[#allocation5] sm:$0xff] %v800
    %805 = vst [vmem:[#allocation5 + $0x8] sm:$0xff] %v801
    %806 = vst [vmem:[#allocation5 + $0x10] sm:$0xff] %v802
    %807 = vst [vmem:[#allocation5 + $0x18] sm:$0xff] %v803
    // Predicated region
    $region38: #{tpu_custom_call.1} parent=1 // pred_check
      _
    $region39: #{tpu_custom_call.1} parent=1 // pred_check_branch
      %809 = sbr.rel (0) target = $region41
    $region40: #{tpu_custom_call.1} parent=1 // pred_region
      %s811 = ssub.s32 512, 512
      %812 = vsyncadd [#allocation4], %s811
      %s814 = sshll.u32 [#allocation5], 4
      %s815 = int_to_ptr.vmem [resolvable:$true] %s814
      %817 = dma.vmem_to_hbm [thread:$0]  %s815, 512, %s8, [#allocation4]
    $region41: #{tpu_custom_call.1} parent=1 // pred_fallthru
      _
    // Predicated region
    $region42: #{tpu_custom_call.1} parent=1 // pred_check
      _
    $region43: #{tpu_custom_call.1} parent=1 // pred_check_branch
      %819 = sbr.rel (0) target = $region45
    $region44: #{tpu_custom_call.1} parent=1 // pred_region
      %820 = dma.done [#allocation4], 512
    $region45: #{tpu_custom_call.1} parent=1 // pred_fallthru
      _
    %821 = vsyncpa [#allocation3], 1
    %822 = vsyncpa [#allocation4], 1

</llo_original>
